<compile_context>
chip_gen: v7x
topology: tpu7x:2x2x1
jax: 0.10.0
libtpu: 0.0.40
codegen_flags: <defaults>
</compile_context>

<pallas_src>
import functools

import jax
import jax.numpy as jnp
from jax.experimental import pallas as pl
from jax.experimental.pallas import tpu as pltpu


# ----------------------------------------------------------------------------
# Pallas kernel: single program, fused subject-position linear + broadcast add
# + object linear (bf16 MXU, f32 acc) + sigmoid^4 over the full (B*S, H) slab.
# ----------------------------------------------------------------------------
def _object_head_kernel(sp_ref,      # SMEM  (B, 2)        subject_position
                        wsp_ref,     # VMEM  (2, H)  f32   dense_subject_position weight (in,out)
                        bsp_ref,     # VMEM  (1, H)  f32   dense_subject_position bias
                        enc_ref,     # VMEM  (B*S, H) f32  encoder output, batch*seq flattened
                        wobj_ref,    # VMEM  (H, P2p) bf16 dense_object weight (in,out), lane-padded
                        bobj_ref,    # VMEM  (1, P2p) f32  dense_object bias, lane-padded
                        o_ref,       # VMEM  (B*S, P2p) f32 output
                        x_scratch,   # VMEM  (B*S, H) f32  fused activation slab
                        *, batch, seq):
    wsp = wsp_ref[...]               # (2, H)
    bsp = bsp_ref[...]               # (1, H)

    # dense_subject_position: K=2 linear done as two scalar*row FMAs on the VPU
    # (no degenerate MXU matmul), fused with the broadcast-add over the
    # sequence.  `batch`/`seq` are static, so this unrolls at trace time.
    for b in range(batch):
        s0 = sp_ref[b, 0]
        s1 = sp_ref[b, 1]
        sp_row = s0 * wsp[0:1, :] + s1 * wsp[1:2, :] + bsp          # (1, H)
        lo = b * seq
        x_scratch[lo:lo + seq, :] = enc_ref[lo:lo + seq, :] + sp_row

    # dense_object: one (B*S, H) @ (H, P2p) MXU matmul, bf16 in / f32 acc.
    x = x_scratch[...].astype(jnp.bfloat16)
    y = jnp.dot(x, wobj_ref[...], preferred_element_type=jnp.float32)
    y = y + bobj_ref[...]

    # sigmoid then pow(., 4)
    z = jax.nn.sigmoid(y)
    z2 = z * z
    o_ref[...] = (z2 * z2).astype(o_ref.dtype)


def object_head_pallas(enc_out, subject_position, w_sp, b_sp, w_obj, b_obj,
                       predicate2id_num):
    """Fused object head.  enc_out: (B,S,H) f32, subject_position: (B,2) f32."""
    B, S, H = enc_out.shape
    P2 = 2 * predicate2id_num
    assert w_sp.shape == (2, H) and w_obj.shape == (H, P2)

    # Lane-pad the object output dim to a multiple of 128 so stores stay
    # unmasked for any predicate2id_num; slice the padding off afterwards.
    P2p = ((P2 + 127) // 128) * 128
    if P2p != P2:
        w_obj = jnp.pad(w_obj, ((0, 0), (0, P2p - P2)))
        b_obj = jnp.pad(b_obj, ((0, P2p - P2),))

    # bf16 weight: halves the dominant DMA and uses the native MXU bf16 path.
    w_obj_bf16 = w_obj.astype(jnp.bfloat16)
    b_sp2 = b_sp.reshape(1, H).astype(jnp.float32)
    b_obj2 = b_obj.reshape(1, P2p).astype(jnp.float32)
    enc2d = enc_out.reshape(B * S, H).astype(jnp.float32)           # layout glue

    kernel = functools.partial(_object_head_kernel, batch=B, seq=S)

    flops = 2 * B * S * H * P2p + 6 * B * S * H
    bytes_accessed = (enc2d.size * 4 + w_obj_bf16.size * 2 + B * S * P2p * 4
                      + (2 * H + H + P2p + 2 * B) * 4)

    out = pl.pallas_call(
        kernel,
        out_shape=jax.ShapeDtypeStruct((B * S, P2p), jnp.float32),
        grid_spec=pltpu.PrefetchScalarGridSpec(
            num_scalar_prefetch=0,
            grid=(1,),                                   # single program
            in_specs=[
                pl.BlockSpec(memory_space=pltpu.SMEM),          # subject_position
                pl.BlockSpec((2, H), lambda i: (0, 0)),          # w_sp
                pl.BlockSpec((1, H), lambda i: (0, 0)),          # b_sp
                pl.BlockSpec((B * S, H), lambda i: (0, 0)),      # encoder output (flat)
                pl.BlockSpec((H, P2p), lambda i: (0, 0)),        # w_obj (bf16)
                pl.BlockSpec((1, P2p), lambda i: (0, 0)),        # b_obj
            ],
            out_specs=pl.BlockSpec((B * S, P2p), lambda i: (0, 0)),
            scratch_shapes=[pltpu.VMEM((B * S, H), jnp.float32)],
        ),
        compiler_params=pltpu.CompilerParams(
            dimension_semantics=("arbitrary",)),
        cost_estimate=pl.CostEstimate(
            flops=flops,
            transcendentals=B * S * P2p,
            bytes_accessed=bytes_accessed),
    )(subject_position.astype(jnp.float32), w_sp.astype(jnp.float32),
      b_sp2, enc2d, w_obj_bf16, b_obj2)

    out = out[:, :P2]
    # torch.reshape(object_out, (B, S, predicate2id_num, 2))
    return out.reshape(B, S, predicate2id_num, 2)


# ----------------------------------------------------------------------------
# Synthetic encoder (stand-in for `subject_model`) + full forward.
# ----------------------------------------------------------------------------
def init_params(key, vocab_size, hidden, predicate2id_num):
    ks = jax.random.split(key, 6)
    scale = 0.02
    return {
        "embedding": scale * jax.random.normal(ks[0], (vocab_size, hidden), jnp.float32),
        "w_subj":    scale * jax.random.normal(ks[1], (hidden, 2), jnp.float32),
        "b_subj":    jnp.zeros((2,), jnp.float32),
        # dense_subject_position: Linear(2, 768)  -> stored as (in, out)
        "w_sp":      scale * jax.random.normal(ks[2], (2, hidden), jnp.float32),
        "b_sp":      0.01 * jax.random.normal(ks[3], (hidden,), jnp.float32),
        # dense_object: Linear(768, predicate2id_num * 2)  -> stored as (in, out)
        "w_obj":     scale * jax.random.normal(ks[4], (hidden, 2 * predicate2id_num), jnp.float32),
        "b_obj":     0.01 * jax.random.normal(ks[5], (2 * predicate2id_num,), jnp.float32),
    }


def object_model_a_forward(params, input_ids, subject_position,
                           attention_mask=None, *, predicate2id_num):
    # --- encoder (synthetic subject_model; glue, plain JAX) -------------------
    emb = params["embedding"][input_ids]                     # (B, S, H)
    if attention_mask is not None:
        emb = emb * attention_mask[..., None].astype(emb.dtype)
    enc_out = jnp.tanh(emb)                                  # (B, S, H)
    subject_out = jax.nn.sigmoid(
        enc_out @ params["w_subj"] + params["b_subj"])       # (B, S, 2)

    # --- fused object head (Pallas kernel) ------------------------------------
    object_out = object_head_pallas(
        enc_out, subject_position,
        params["w_sp"], params["b_sp"],
        params["w_obj"], params["b_obj"],
        predicate2id_num)                                    # (B, S, P, 2)

    return subject_out, object_out


if __name__ == "__main__":
    B, S, H = 2, 8, 768           # hidden=768 is fixed by the module definition
    VOCAB = 32
    PREDICATE2ID_NUM = 64         # -> dense_object out features = 128 (lane-aligned)

    key = jax.random.PRNGKey(0)
    k_par, k_ids, k_sp = jax.random.split(key, 3)

    params = init_params(k_par, VOCAB, H, PREDICATE2ID_NUM)
    input_ids = jax.random.randint(k_ids, (B, S), 0, VOCAB, dtype=jnp.int32)
    subject_position = jax.random.normal(k_sp, (B, 2), jnp.float32)
    attention_mask = jnp.ones((B, S), jnp.float32)

    subject_out, object_out = object_model_a_forward(
        params, input_ids, subject_position, attention_mask,
        predicate2id_num=PREDICATE2ID_NUM)
    jax.block_until_ready((subject_out, object_out))

    # Cross-check the Pallas head against a pure-JAX f32 reference (the kernel
    # uses bf16 MXU operands with f32 accumulation, so tolerance is relaxed).
    emb = params["embedding"][input_ids] * attention_mask[..., None]
    enc_out = jnp.tanh(emb)
    sp = subject_position @ params["w_sp"] + params["b_sp"]          # (B, H)
    ref = enc_out + sp[:, None, :]
    ref = ref @ params["w_obj"] + params["b_obj"]
    ref = jax.nn.sigmoid(ref.reshape(B, S, PREDICATE2ID_NUM, 2)) ** 4

    assert subject_out.shape == (B, S, 2)
    assert object_out.shape == (B, S, PREDICATE2ID_NUM, 2)
    assert jnp.allclose(object_out, ref, atol=2e-3, rtol=2e-3), (
        float(jnp.max(jnp.abs(object_out - ref))))

    print("KERNEL_OK")
</pallas_src>

<mosaic_0001>
module attributes {stable_mosaic.version = 11 : i64} {
  func.func @_object_head_kernel(%arg0: i32, %arg1: memref<2x2xf32, #tpu.memory_space<smem>>, %arg2: memref<2x768xf32, #tpu.memory_space<vmem>>, %arg3: memref<1x768xf32, #tpu.memory_space<vmem>>, %arg4: memref<16x768xf32, #tpu.memory_space<vmem>>, %arg5: memref<768x128xbf16, #tpu.memory_space<vmem>>, %arg6: memref<1x128xf32, #tpu.memory_space<vmem>>, %arg7: memref<16x128xf32, #tpu.memory_space<vmem>>, %arg8: memref<16x768xf32, #tpu.memory_space<vmem>>) attributes {dimension_semantics = [#tpu.dimension_semantics<arbitrary>], iteration_bounds = array<i64: 1>, scalar_prefetch = 0 : i64, scratch_operands = 1 : i64, tpu.core_type = #tpu.core_type<tc>, window_params = [{transform_indices = @transform_0, window_bounds = array<i64: 2, 2>}, {pipeline_mode = #tpu.pipeline_mode<synchronous>, transform_indices = @transform_1, window_bounds = array<i64: 2, 768>}, {pipeline_mode = #tpu.pipeline_mode<synchronous>, transform_indices = @transform_2, window_bounds = array<i64: 1, 768>}, {pipeline_mode = #tpu.pipeline_mode<synchronous>, transform_indices = @transform_3, window_bounds = array<i64: 16, 768>}, {pipeline_mode = #tpu.pipeline_mode<synchronous>, transform_indices = @transform_4, window_bounds = array<i64: 768, 128>}, {pipeline_mode = #tpu.pipeline_mode<synchronous>, transform_indices = @transform_5, window_bounds = array<i64: 1, 128>}, {pipeline_mode = #tpu.pipeline_mode<synchronous>, transform_indices = @transform_6, window_bounds = array<i64: 16, 128>}]} {
    %c0 = arith.constant 0 : index
    %c0_0 = arith.constant 0 : index
    %0 = vector.load %arg2[%c0, %c0_0] : memref<2x768xf32, #tpu.memory_space<vmem>>, vector<2x768xf32>
    %c0_1 = arith.constant 0 : index
    %c0_2 = arith.constant 0 : index
    %1 = vector.load %arg3[%c0_1, %c0_2] : memref<1x768xf32, #tpu.memory_space<vmem>>, vector<1x768xf32>
    %c0_3 = arith.constant 0 : index
    %c0_4 = arith.constant 0 : index
    %2 = memref.load %arg1[%c0_3, %c0_4] : memref<2x2xf32, #tpu.memory_space<smem>>
    %c0_5 = arith.constant 0 : index
    %c1 = arith.constant 1 : index
    %3 = memref.load %arg1[%c0_5, %c1] : memref<2x2xf32, #tpu.memory_space<smem>>
    %4 = vector.extract_strided_slice %0 {offsets = [0, 0], sizes = [1, 768], strides = [1, 1]} : vector<2x768xf32> to vector<1x768xf32>
    %5 = vector.broadcast %2 : f32 to vector<1x768xf32>
    %6 = arith.mulf %5, %4 : vector<1x768xf32>
    %7 = vector.extract_strided_slice %0 {offsets = [1, 0], sizes = [1, 768], strides = [1, 1]} : vector<2x768xf32> to vector<1x768xf32>
    %8 = vector.broadcast %3 : f32 to vector<1x768xf32>
    %9 = arith.mulf %8, %7 : vector<1x768xf32>
    %10 = arith.addf %6, %9 : vector<1x768xf32>
    %11 = arith.addf %10, %1 : vector<1x768xf32>
    %c0_6 = arith.constant 0 : index
    %c0_7 = arith.constant 0 : index
    %12 = vector.load %arg4[%c0_6, %c0_7] : memref<16x768xf32, #tpu.memory_space<vmem>>, vector<8x768xf32>
    %13 = vector.broadcast %11 : vector<1x768xf32> to vector<8x768xf32>
    %14 = arith.addf %12, %13 : vector<8x768xf32>
    %c0_8 = arith.constant 0 : index
    %c0_9 = arith.constant 0 : index
    %15 = vector.load %arg8[%c0_8, %c0_9] : memref<16x768xf32, #tpu.memory_space<vmem>>, vector<8x768xf32>
    tpu.vector_store %arg8[%c0_8, %c0_9], %14 {strides = array<i32>} : memref<16x768xf32, #tpu.memory_space<vmem>>, vector<8x768xf32>,
    %c1_10 = arith.constant 1 : index
    %c0_11 = arith.constant 0 : index
    %16 = memref.load %arg1[%c1_10, %c0_11] : memref<2x2xf32, #tpu.memory_space<smem>>
    %c1_12 = arith.constant 1 : index
    %c1_13 = arith.constant 1 : index
    %17 = memref.load %arg1[%c1_12, %c1_13] : memref<2x2xf32, #tpu.memory_space<smem>>
    %18 = vector.extract_strided_slice %0 {offsets = [0, 0], sizes = [1, 768], strides = [1, 1]} : vector<2x768xf32> to vector<1x768xf32>
    %19 = vector.broadcast %16 : f32 to vector<1x768xf32>
    %20 = arith.mulf %19, %18 : vector<1x768xf32>
    %21 = vector.extract_strided_slice %0 {offsets = [1, 0], sizes = [1, 768], strides = [1, 1]} : vector<2x768xf32> to vector<1x768xf32>
    %22 = vector.broadcast %17 : f32 to vector<1x768xf32>
    %23 = arith.mulf %22, %21 : vector<1x768xf32>
    %24 = arith.addf %20, %23 : vector<1x768xf32>
    %25 = arith.addf %24, %1 : vector<1x768xf32>
    %c8 = arith.constant 8 : index
    %c0_14 = arith.constant 0 : index
    %26 = vector.load %arg4[%c8, %c0_14] : memref<16x768xf32, #tpu.memory_space<vmem>>, vector<8x768xf32>
    %27 = vector.broadcast %25 : vector<1x768xf32> to vector<8x768xf32>
    %28 = arith.addf %26, %27 : vector<8x768xf32>
    %c8_15 = arith.constant 8 : index
    %c0_16 = arith.constant 0 : index
    %29 = vector.load %arg8[%c8_15, %c0_16] : memref<16x768xf32, #tpu.memory_space<vmem>>, vector<8x768xf32>
    tpu.vector_store %arg8[%c8_15, %c0_16], %28 {strides = array<i32>} : memref<16x768xf32, #tpu.memory_space<vmem>>, vector<8x768xf32>,
    %c0_17 = arith.constant 0 : index
    %c0_18 = arith.constant 0 : index
    %30 = vector.load %arg8[%c0_17, %c0_18] : memref<16x768xf32, #tpu.memory_space<vmem>>, vector<16x768xf32>
    %31 = arith.truncf %30 : vector<16x768xf32> to vector<16x768xbf16>
    %c0_19 = arith.constant 0 : index
    %c0_20 = arith.constant 0 : index
    %32 = vector.load %arg5[%c0_19, %c0_20] : memref<768x128xbf16, #tpu.memory_space<vmem>>, vector<768x128xbf16>
    %cst = arith.constant dense<0.000000e+00> : vector<16x128xf32>
    %33 = tpu.matmul %31, %32, %cst {dimension_numbers = #tpu.dot_dimension_numbers<[1], [0], [0], [1], [0, 0, 1, 1], [], []>} : vector<16x768xbf16>, vector<768x128xbf16>, vector<16x128xf32> -> vector<16x128xf32>
    %c0_21 = arith.constant 0 : index
    %c0_22 = arith.constant 0 : index
    %34 = vector.load %arg6[%c0_21, %c0_22] : memref<1x128xf32, #tpu.memory_space<vmem>>, vector<1x128xf32>
    %35 = vector.broadcast %34 : vector<1x128xf32> to vector<16x128xf32>
    %36 = arith.addf %33, %35 : vector<16x128xf32>
    %37 = arith.negf %36 : vector<16x128xf32>
    %38 = math.exp %37 : vector<16x128xf32>
    %cst_23 = arith.constant 1.000000e+00 : f32
    %39 = vector.broadcast %cst_23 : f32 to vector<16x128xf32>
    %40 = arith.addf %39, %38 : vector<16x128xf32>
    %41 = arith.divf %39, %40 : vector<16x128xf32>
    %42 = arith.mulf %41, %41 : vector<16x128xf32>
    %43 = arith.mulf %42, %42 : vector<16x128xf32>
    %c0_24 = arith.constant 0 : index
    %c0_25 = arith.constant 0 : index
    %44 = vector.load %arg7[%c0_24, %c0_25] : memref<16x128xf32, #tpu.memory_space<vmem>>, vector<16x128xf32>
    tpu.vector_store %arg7[%c0_24, %c0_25], %43 {strides = array<i32>} : memref<16x128xf32, #tpu.memory_space<vmem>>, vector<16x128xf32>,
    return
  }
  func.func @transform_0(%arg0: i32) -> (i32, i32) {
    %c0_i32 = arith.constant 0 : i32
    %c0_i32_0 = arith.constant 0 : i32
    %c0_i32_1 = arith.constant 0 : i32
    return %c0_i32, %c0_i32_0 : i32, i32
  }
  func.func @transform_1(%arg0: i32) -> (i32, i32) {
    %c0_i32 = arith.constant 0 : i32
    %c0_i32_0 = arith.constant 0 : i32
    %c0_i32_1 = arith.constant 0 : i32
    return %c0_i32, %c0_i32_0 : i32, i32
  }
  func.func @transform_2(%arg0: i32) -> (i32, i32) {
    %c0_i32 = arith.constant 0 : i32
    %c0_i32_0 = arith.constant 0 : i32
    %c0_i32_1 = arith.constant 0 : i32
    return %c0_i32, %c0_i32_0 : i32, i32
  }
  func.func @transform_3(%arg0: i32) -> (i32, i32) {
    %c0_i32 = arith.constant 0 : i32
    %c0_i32_0 = arith.constant 0 : i32
    %c0_i32_1 = arith.constant 0 : i32
    return %c0_i32, %c0_i32_0 : i32, i32
  }
  func.func @transform_4(%arg0: i32) -> (i32, i32) {
    %c0_i32 = arith.constant 0 : i32
    %c0_i32_0 = arith.constant 0 : i32
    %c0_i32_1 = arith.constant 0 : i32
    return %c0_i32, %c0_i32_0 : i32, i32
  }
  func.func @transform_5(%arg0: i32) -> (i32, i32) {
    %c0_i32 = arith.constant 0 : i32
    %c0_i32_0 = arith.constant 0 : i32
    %c0_i32_1 = arith.constant 0 : i32
    return %c0_i32, %c0_i32_0 : i32, i32
  }
  func.func @transform_6(%arg0: i32) -> (i32, i32) {
    %c0_i32 = arith.constant 0 : i32
    %c0_i32_0 = arith.constant 0 : i32
    %c0_i32_1 = arith.constant 0 : i32
    return %c0_i32, %c0_i32_0 : i32, i32
  }
}

</mosaic_0001>

<llo_original>
// kernel: tpu_custom_call.1
$region0: #{tpu_custom_call.1}
  #allocation0 [shape = 'u32[]', space=smem, size = 0x4, offset = 0x4, fixed_abs, tag = 'smem constant byte address 0x4 - core index']
  #allocation1 [shape = 'u32[144,128]{1,0:T(1,128)}', space=vmem, size = 0x12000, scoped, tag = 'internal scratch']
  #allocation2 [shape = 'f32[16,768]{1,0:T(8,128)}', space=vmem, size = 0xc000, scoped, tag = 'scratch operand']
  %s0 = inlined_call_operand.hbm [shape: f32[2,2], index: 0, kind: input, shape index: {}]
  %s1 = inlined_call_operand.hbm [shape: f32[2,768], index: 1, kind: input, shape index: {}]
  %s2 = inlined_call_operand.vmem [shape: f32[1,768], index: 2, kind: input, shape index: {}]
  %s3 = inlined_call_operand.hbm [shape: f32[16,768], index: 3, kind: input, shape index: {}]
  %s4 = inlined_call_operand.hbm [shape: bf16[768,128], index: 4, kind: input, shape index: {}]
  %s5 = inlined_call_operand.vmem [shape: f32[1,128], index: 5, kind: input, shape index: {}]
  %s6 = inlined_call_operand.hbm [shape: f32[16,128], index: 6, kind: output, shape index: {}]
  %s7 = sld [smem:[#allocation0]]
  $region50: #{tpu_custom_call.1} parent=0
    _
  %s9 = ssub.s32 1, %s7
  %s10 = scalar_select 0, %s9, %s7
  $region1: #{tpu_custom_call.1} parent=0
    #allocation3 [shape = 'u8[1024]{0}', space=smem, size = 0x400, scoped, tag = 'input window, operand 0, single buffered']
    #allocation4 [shape = 's32[1]{0}', space=sflag, size = 0x4, scoped, tag = 'scoped memory for tpu_custom_call.1']
    #allocation5 [shape = 's32[1]{0}', space=sflag, size = 0x4, scoped, tag = 'scoped memory for tpu_custom_call.1']
    #allocation6 [shape = 's32[1]{0}', space=sflag, size = 0x4, scoped, tag = 'scoped memory for tpu_custom_call.1']
    #allocation7 [shape = 'u8[6144]{0}', space=vmem, size = 0x1800, scoped, tag = 'input window, operand 1, single buffered']
    #allocation8 [shape = 'u8[49152]{0}', space=vmem, size = 0xc000, scoped, tag = 'input window, operand 3, single buffered']
    #allocation9 [shape = 's32[1]{0}', space=sflag, size = 0x4, scoped, tag = 'scoped memory for tpu_custom_call.1']
    #allocation10 [shape = 'u8[196608]{0}', space=vmem, size = 0x30000, scoped, tag = 'input window, operand 4, single buffered']
    #allocation11 [shape = 'u8[8192]{0}', space=vmem, size = 0x2000, scoped, tag = 'output window, operand 0, single buffered']
    %11 = vsyncpa [#allocation6], 0
    %12 = vsyncpa [#allocation4], 0
    %13 = vsyncpa [#allocation9], 0
    %14 = vsyncpa [#allocation5], 0
    // Predicated region
    $region2: #{tpu_custom_call.1} parent=1 // pred_check
      _
    $region3: #{tpu_custom_call.1} parent=1 // pred_check_branch
      %16 = sbr.rel (0) target = $region5
    $region4: #{tpu_custom_call.1} parent=1 // pred_region
      %s18 = ssub.s32 32, 32
      %19 = vsyncadd [#allocation6], %s18
      %22 = dma.hbm_to_smem %s0, 32, [#allocation3], [#allocation6]
    $region5: #{tpu_custom_call.1} parent=1 // pred_fallthru
      _
    // Predicated region
    $region6: #{tpu_custom_call.1} parent=1 // pred_check
      _
    $region7: #{tpu_custom_call.1} parent=1 // pred_check_branch
      %24 = sbr.rel (0) target = $region9
    $region8: #{tpu_custom_call.1} parent=1 // pred_region
      %s26 = ssub.s32 192, 192
      %27 = vsyncadd [#allocation4], %s26
      %s29 = sshll.u32 [#allocation7], 4
      %s30 = int_to_ptr.vmem [resolvable:$true] %s29
      %32 = dma.hbm_to_vmem [thread:$0]  %s1, 192, %s30, [#allocation4]
    $region9: #{tpu_custom_call.1} parent=1 // pred_fallthru
      _
    // Predicated region
    $region10: #{tpu_custom_call.1} parent=1 // pred_check
      _
    $region11: #{tpu_custom_call.1} parent=1 // pred_check_branch
      %34 = sbr.rel (0) target = $region13
    $region12: #{tpu_custom_call.1} parent=1 // pred_region
      _
    $region13: #{tpu_custom_call.1} parent=1 // pred_fallthru
      _
    // Predicated region
    $region14: #{tpu_custom_call.1} parent=1 // pred_check
      _
    $region15: #{tpu_custom_call.1} parent=1 // pred_check_branch
      %36 = sbr.rel (0) target = $region17
    $region16: #{tpu_custom_call.1} parent=1 // pred_region
      %s38 = ssub.s32 1536, 1536
      %39 = vsyncadd [#allocation9], %s38
      %s40 = sshll.u32 [#allocation8], 4
      %s41 = int_to_ptr.vmem [resolvable:$true] %s40
      %46 = dma.hbm_to_vmem [thread:$0]  %s3, 1536, %s41, [#allocation9], 768, 768, 48
    $region17: #{tpu_custom_call.1} parent=1 // pred_fallthru
      _
    // Predicated region
    $region18: #{tpu_custom_call.1} parent=1 // pred_check
      _
    $region19: #{tpu_custom_call.1} parent=1 // pred_check_branch
      %48 = sbr.rel (0) target = $region21
    $region20: #{tpu_custom_call.1} parent=1 // pred_region
      %s50 = ssub.s32 6144, 6144
      %51 = vsyncadd [#allocation9], %s50
      %s52 = sshll.u32 [#allocation10], 4
      %s53 = int_to_ptr.vmem [resolvable:$true] %s52
      %58 = dma.hbm_to_vmem [thread:$0]  %s4, 6144, %s53, [#allocation9], 64, 64, 4
    $region21: #{tpu_custom_call.1} parent=1 // pred_fallthru
      _
    // Predicated region
    $region22: #{tpu_custom_call.1} parent=1 // pred_check
      _
    $region23: #{tpu_custom_call.1} parent=1 // pred_check_branch
      %60 = sbr.rel (0) target = $region25
    $region24: #{tpu_custom_call.1} parent=1 // pred_region
      _
    $region25: #{tpu_custom_call.1} parent=1 // pred_fallthru
      _
    // Predicated region
    $region26: #{tpu_custom_call.1} parent=1 // pred_check
      _
    $region27: #{tpu_custom_call.1} parent=1 // pred_check_branch
      %62 = sbr.rel (0) target = $region29
    $region28: #{tpu_custom_call.1} parent=1 // pred_region
      %63 = dma.done [#allocation6], 32
    $region29: #{tpu_custom_call.1} parent=1 // pred_fallthru
      _
    // Predicated region
    $region30: #{tpu_custom_call.1} parent=1 // pred_check
      _
    $region31: #{tpu_custom_call.1} parent=1 // pred_check_branch
      %65 = sbr.rel (0) target = $region33
    $region32: #{tpu_custom_call.1} parent=1 // pred_region
      %66 = dma.done [#allocation4], 192
    $region33: #{tpu_custom_call.1} parent=1 // pred_fallthru
      _
    // Predicated region
    $region34: #{tpu_custom_call.1} parent=1 // pred_check
      _
    $region35: #{tpu_custom_call.1} parent=1 // pred_check_branch
      %68 = sbr.rel (0) target = $region37
    $region36: #{tpu_custom_call.1} parent=1 // pred_region
      %69 = dma.done [#allocation9], 1536
    $region37: #{tpu_custom_call.1} parent=1 // pred_fallthru
      _
    // Predicated region
    $region38: #{tpu_custom_call.1} parent=1 // pred_check
      _
    $region39: #{tpu_custom_call.1} parent=1 // pred_check_branch
      %71 = sbr.rel (0) target = $region41
    $region40: #{tpu_custom_call.1} parent=1 // pred_region
      %72 = dma.done [#allocation9], 6144
    $region41: #{tpu_custom_call.1} parent=1 // pred_fallthru
      _
    %73 = sfence
    %v75 = vld [vmem:[#allocation7] sm:$0xff]
    %v76 = vld [vmem:[#allocation7 + $0x8] sm:$0xf]
    %v77 = vld [vmem:[%s2] sm:$0x3f]
    %s78 = sld [smem:[#allocation3]]
    %s79 = sld [smem:[#allocation3 + $0x1]]
    %v80 = vstv %s78
    %v81 = vmul.f32 %v80, %v75
    %v82 = vmul.f32 %v80, %v76
    %v83 = vstv %s79
    %v84 = vmul.f32 %v83, %v75
    %v85 = vmul.f32 %v83, %v76
    %v88 = vrot.slane %v84, 7
    %v89 = vrot.slane %v88, 2
    %v90 = vrot.slane %v85, 7
    %v91 = vrot.slane %v90, 2
    %v94 = vadd.f32 %v81, %v89
    %v95 = vadd.f32 %v82, %v91
    %v98 = vunpack.c.l.s4 857870592
    %v99 = vunpack.c.0.s8 %v98
    %v100 = vlaneseq
    %v101 = vshrl.u32 %v100, 7
    %v102 = vsub.s32 %v99, %v101
    %v103 = vrot.slane %v77, %v102
    %v105 = vunpack.c.l.s4 2003195204
    %v106 = vunpack.c.0.s8 %v105
    %v107 = vlaneseq
    %v108 = vshrl.u32 %v107, 7
    %v109 = vsub.s32 %v106, %v108
    %v110 = vrot.slane %v77, %v109
    %v113 = vadd.f32 %v94, %v103
    %v114 = vadd.f32 %v95, %v110
    %v115 = vld [vmem:[#allocation8] sm:$0xff]
    %v116 = vld [vmem:[#allocation8 + $0x8] sm:$0xff]
    %v117 = vld [vmem:[#allocation8 + $0x10] sm:$0xff]
    %v118 = vld [vmem:[#allocation8 + $0x18] sm:$0xff]
    %v119 = vld [vmem:[#allocation8 + $0x20] sm:$0xff]
    %v120 = vld [vmem:[#allocation8 + $0x28] sm:$0xff]
    %v123 = vlaneseq
    %v124 = vshrl.u32 %v123, 7
    %v125 = vsub.s32 0, %v124
    %v126 = vrot.slane %v113, %v125
    %v127 = vlaneseq
    %v128 = vshrl.u32 %v127, 7
    %v129 = vsub.s32 2, %v128
    %v130 = vrot.slane %v113, %v129
    %v131 = vlaneseq
    %v132 = vshrl.u32 %v131, 7
    %v133 = vsub.s32 4, %v132
    %v134 = vrot.slane %v113, %v133
    %v135 = vlaneseq
    %v136 = vshrl.u32 %v135, 7
    %v137 = vsub.s32 6, %v136
    %v138 = vrot.slane %v113, %v137
    %v139 = vlaneseq
    %v140 = vshrl.u32 %v139, 7
    %v141 = vsub.s32 0, %v140
    %v142 = vrot.slane %v114, %v141
    %v143 = vlaneseq
    %v144 = vshrl.u32 %v143, 7
    %v145 = vsub.s32 2, %v144
    %v146 = vrot.slane %v114, %v145
    %v153 = vlaneseq
    %v154 = vshrl.u32 %v153, 7
    %v155 = vsub.s32 0, %v154
    %v156 = vrot.slane %v126, %v155
    %v157 = vlaneseq
    %v158 = vshrl.u32 %v157, 7
    %v159 = vsub.s32 0, %v158
    %v160 = vrot.slane %v130, %v159
    %v161 = vlaneseq
    %v162 = vshrl.u32 %v161, 7
    %v163 = vsub.s32 0, %v162
    %v164 = vrot.slane %v134, %v163
    %v165 = vlaneseq
    %v166 = vshrl.u32 %v165, 7
    %v167 = vsub.s32 0, %v166
    %v168 = vrot.slane %v138, %v167
    %v169 = vlaneseq
    %v170 = vshrl.u32 %v169, 7
    %v171 = vsub.s32 0, %v170
    %v172 = vrot.slane %v142, %v171
    %v173 = vlaneseq
    %v174 = vshrl.u32 %v173, 7
    %v175 = vsub.s32 0, %v174
    %v176 = vrot.slane %v146, %v175
    %v177 = vadd.f32 %v115, %v156
    %v178 = vadd.f32 %v116, %v160
    %v179 = vadd.f32 %v117, %v164
    %v180 = vadd.f32 %v118, %v168
    %v181 = vadd.f32 %v119, %v172
    %v182 = vadd.f32 %v120, %v176
    %183 = vst [vmem:[#allocation2] sm:$0xff] %v177
    %184 = vst [vmem:[#allocation2 + $0x8] sm:$0xff] %v178
    %185 = vst [vmem:[#allocation2 + $0x10] sm:$0xff] %v179
    %186 = vst [vmem:[#allocation2 + $0x18] sm:$0xff] %v180
    %187 = vst [vmem:[#allocation2 + $0x20] sm:$0xff] %v181
    %188 = vst [vmem:[#allocation2 + $0x28] sm:$0xff] %v182
    %s189 = sld [smem:[#allocation3 + $0x80]]
    %s190 = sld [smem:[#allocation3 + $0x81]]
    %v191 = vstv %s189
    %v192 = vmul.f32 %v191, %v75
    %v193 = vmul.f32 %v191, %v76
    %v194 = vstv %s190
    %v195 = vmul.f32 %v194, %v75
    %v196 = vmul.f32 %v194, %v76
    %v199 = vrot.slane %v195, 7
    %v200 = vrot.slane %v199, 2
    %v201 = vrot.slane %v196, 7
    %v202 = vrot.slane %v201, 2
    %v205 = vadd.f32 %v192, %v200
    %v206 = vadd.f32 %v193, %v202
    %v207 = vadd.f32 %v205, %v103
    %v208 = vadd.f32 %v206, %v110
    %v209 = vld [vmem:[#allocation8 + $0x30] sm:$0xff]
    %v210 = vld [vmem:[#allocation8 + $0x38] sm:$0xff]
    %v211 = vld [vmem:[#allocation8 + $0x40] sm:$0xff]
    %v212 = vld [vmem:[#allocation8 + $0x48] sm:$0xff]
    %v213 = vld [vmem:[#allocation8 + $0x50] sm:$0xff]
    %v214 = vld [vmem:[#allocation8 + $0x58] sm:$0xff]
    %v217 = vlaneseq
    %v218 = vshrl.u32 %v217, 7
    %v219 = vsub.s32 0, %v218
    %v220 = vrot.slane %v207, %v219
    %v221 = vlaneseq
    %v222 = vshrl.u32 %v221, 7
    %v223 = vsub.s32 2, %v222
    %v224 = vrot.slane %v207, %v223
    %v225 = vlaneseq
    %v226 = vshrl.u32 %v225, 7
    %v227 = vsub.s32 4, %v226
    %v228 = vrot.slane %v207, %v227
    %v229 = vlaneseq
    %v230 = vshrl.u32 %v229, 7
    %v231 = vsub.s32 6, %v230
    %v232 = vrot.slane %v207, %v231
    %v233 = vlaneseq
    %v234 = vshrl.u32 %v233, 7
    %v235 = vsub.s32 0, %v234
    %v236 = vrot.slane %v208, %v235
    %v237 = vlaneseq
    %v238 = vshrl.u32 %v237, 7
    %v239 = vsub.s32 2, %v238
    %v240 = vrot.slane %v208, %v239
    %v247 = vlaneseq
    %v248 = vshrl.u32 %v247, 7
    %v249 = vsub.s32 0, %v248
    %v250 = vrot.slane %v220, %v249
    %v251 = vlaneseq
    %v252 = vshrl.u32 %v251, 7
    %v253 = vsub.s32 0, %v252
    %v254 = vrot.slane %v224, %v253
    %v255 = vlaneseq
    %v256 = vshrl.u32 %v255, 7
    %v257 = vsub.s32 0, %v256
    %v258 = vrot.slane %v228, %v257
    %v259 = vlaneseq
    %v260 = vshrl.u32 %v259, 7
    %v261 = vsub.s32 0, %v260
    %v262 = vrot.slane %v232, %v261
    %v263 = vlaneseq
    %v264 = vshrl.u32 %v263, 7
    %v265 = vsub.s32 0, %v264
    %v266 = vrot.slane %v236, %v265
    %v267 = vlaneseq
    %v268 = vshrl.u32 %v267, 7
    %v269 = vsub.s32 0, %v268
    %v270 = vrot.slane %v240, %v269
    %v271 = vadd.f32 %v209, %v250
    %v272 = vadd.f32 %v210, %v254
    %v273 = vadd.f32 %v211, %v258
    %v274 = vadd.f32 %v212, %v262
    %v275 = vadd.f32 %v213, %v266
    %v276 = vadd.f32 %v214, %v270
    %277 = vst [vmem:[#allocation2 + $0x30] sm:$0xff] %v271
    %278 = vst [vmem:[#allocation2 + $0x38] sm:$0xff] %v272
    %279 = vst [vmem:[#allocation2 + $0x40] sm:$0xff] %v273
    %280 = vst [vmem:[#allocation2 + $0x48] sm:$0xff] %v274
    %281 = vst [vmem:[#allocation2 + $0x50] sm:$0xff] %v275
    %282 = vst [vmem:[#allocation2 + $0x58] sm:$0xff] %v276
    %v283 = vld [vmem:[#allocation2] sm:$0xff]
    %v284 = vld [vmem:[#allocation2 + $0x8] sm:$0xff]
    %v285 = vld [vmem:[#allocation2 + $0x10] sm:$0xff]
    %v286 = vld [vmem:[#allocation2 + $0x18] sm:$0xff]
    %v287 = vld [vmem:[#allocation2 + $0x20] sm:$0xff]
    %v288 = vld [vmem:[#allocation2 + $0x28] sm:$0xff]
    %v289 = vld [vmem:[#allocation2 + $0x30] sm:$0xff]
    %v290 = vld [vmem:[#allocation2 + $0x38] sm:$0xff]
    %v291 = vld [vmem:[#allocation2 + $0x40] sm:$0xff]
    %v292 = vld [vmem:[#allocation2 + $0x48] sm:$0xff]
    %v293 = vld [vmem:[#allocation2 + $0x50] sm:$0xff]
    %v294 = vld [vmem:[#allocation2 + $0x58] sm:$0xff]
    %v295 = vpack.c.bf16 %v289, %v283
    %v296 = vpack.c.bf16 %v290, %v284
    %v297 = vpack.c.bf16 %v291, %v285
    %v298 = vpack.c.bf16 %v292, %v286
    %v299 = vpack.c.bf16 %v293, %v287
    %v300 = vpack.c.bf16 %v294, %v288
    %v301 = vld [vmem:[#allocation10] sm:$0xf]
    %v302 = vld [vmem:[#allocation10 + $0x4] sm:$0xf]
    %v303 = vld [vmem:[#allocation10 + $0x8] sm:$0xf]
    %v304 = vld [vmem:[#allocation10 + $0xc] sm:$0xf]
    %v305 = vld [vmem:[#allocation10 + $0x10] sm:$0xf]
    %v306 = vld [vmem:[#allocation10 + $0x14] sm:$0xf]
    %v307 = vld [vmem:[#allocation10 + $0x18] sm:$0xf]
    %v308 = vld [vmem:[#allocation10 + $0x1c] sm:$0xf]
    %v309 = vld [vmem:[#allocation10 + $0x20] sm:$0xf]
    %v310 = vld [vmem:[#allocation10 + $0x24] sm:$0xf]
    %v311 = vld [vmem:[#allocation10 + $0x28] sm:$0xf]
    %v312 = vld [vmem:[#allocation10 + $0x2c] sm:$0xf]
    %v313 = vld [vmem:[#allocation10 + $0x30] sm:$0xf]
    %v314 = vld [vmem:[#allocation10 + $0x34] sm:$0xf]
    %v315 = vld [vmem:[#allocation10 + $0x38] sm:$0xf]
    %v316 = vld [vmem:[#allocation10 + $0x3c] sm:$0xf]
    %v317 = vld [vmem:[#allocation10 + $0x40] sm:$0xf]
    %v318 = vld [vmem:[#allocation10 + $0x44] sm:$0xf]
    %v319 = vld [vmem:[#allocation10 + $0x48] sm:$0xf]
    %v320 = vld [vmem:[#allocation10 + $0x4c] sm:$0xf]
    %v321 = vld [vmem:[#allocation10 + $0x50] sm:$0xf]
    %v322 = vld [vmem:[#allocation10 + $0x54] sm:$0xf]
    %v323 = vld [vmem:[#allocation10 + $0x58] sm:$0xf]
    %v324 = vld [vmem:[#allocation10 + $0x5c] sm:$0xf]
    %v325 = vld [vmem:[#allocation10 + $0x60] sm:$0xf]
    %v326 = vld [vmem:[#allocation10 + $0x64] sm:$0xf]
    %v327 = vld [vmem:[#allocation10 + $0x68] sm:$0xf]
    %v328 = vld [vmem:[#allocation10 + $0x6c] sm:$0xf]
    %v329 = vld [vmem:[#allocation10 + $0x70] sm:$0xf]
    %v330 = vld [vmem:[#allocation10 + $0x74] sm:$0xf]
    %v331 = vld [vmem:[#allocation10 + $0x78] sm:$0xf]
    %v332 = vld [vmem:[#allocation10 + $0x7c] sm:$0xf]
    %v333 = vld [vmem:[#allocation10 + $0x80] sm:$0xf]
    %v334 = vld [vmem:[#allocation10 + $0x84] sm:$0xf]
    %v335 = vld [vmem:[#allocation10 + $0x88] sm:$0xf]
    %v336 = vld [vmem:[#allocation10 + $0x8c] sm:$0xf]
    %v337 = vld [vmem:[#allocation10 + $0x90] sm:$0xf]
    %v338 = vld [vmem:[#allocation10 + $0x94] sm:$0xf]
    %v339 = vld [vmem:[#allocation10 + $0x98] sm:$0xf]
    %v340 = vld [vmem:[#allocation10 + $0x9c] sm:$0xf]
    %v341 = vld [vmem:[#allocation10 + $0xa0] sm:$0xf]
    %v342 = vld [vmem:[#allocation10 + $0xa4] sm:$0xf]
    %v343 = vld [vmem:[#allocation10 + $0xa8] sm:$0xf]
    %v344 = vld [vmem:[#allocation10 + $0xac] sm:$0xf]
    %v345 = vld [vmem:[#allocation10 + $0xb0] sm:$0xf]
    %v346 = vld [vmem:[#allocation10 + $0xb4] sm:$0xf]
    %v347 = vld [vmem:[#allocation10 + $0xb8] sm:$0xf]
    %v348 = vld [vmem:[#allocation10 + $0xbc] sm:$0xf]
    %v349 = vld [vmem:[#allocation10 + $0xc0] sm:$0xf]
    %v350 = vld [vmem:[#allocation10 + $0xc4] sm:$0xf]
    %v351 = vld [vmem:[#allocation10 + $0xc8] sm:$0xf]
    %v352 = vld [vmem:[#allocation10 + $0xcc] sm:$0xf]
    %v353 = vld [vmem:[#allocation10 + $0xd0] sm:$0xf]
    %v354 = vld [vmem:[#allocation10 + $0xd4] sm:$0xf]
    %v355 = vld [vmem:[#allocation10 + $0xd8] sm:$0xf]
    %v356 = vld [vmem:[#allocation10 + $0xdc] sm:$0xf]
    %v357 = vld [vmem:[#allocation10 + $0xe0] sm:$0xf]
    %v358 = vld [vmem:[#allocation10 + $0xe4] sm:$0xf]
    %v359 = vld [vmem:[#allocation10 + $0xe8] sm:$0xf]
    %v360 = vld [vmem:[#allocation10 + $0xec] sm:$0xf]
    %v361 = vld [vmem:[#allocation10 + $0xf0] sm:$0xf]
    %v362 = vld [vmem:[#allocation10 + $0xf4] sm:$0xf]
    %v363 = vld [vmem:[#allocation10 + $0xf8] sm:$0xf]
    %v364 = vld [vmem:[#allocation10 + $0xfc] sm:$0xf]
    %v365 = vld [vmem:[#allocation10 + $0x100] sm:$0xf]
    %v366 = vld [vmem:[#allocation10 + $0x104] sm:$0xf]
    %v367 = vld [vmem:[#allocation10 + $0x108] sm:$0xf]
    %v368 = vld [vmem:[#allocation10 + $0x10c] sm:$0xf]
    %v369 = vld [vmem:[#allocation10 + $0x110] sm:$0xf]
    %v370 = vld [vmem:[#allocation10 + $0x114] sm:$0xf]
    %v371 = vld [vmem:[#allocation10 + $0x118] sm:$0xf]
    %v372 = vld [vmem:[#allocation10 + $0x11c] sm:$0xf]
    %v373 = vld [vmem:[#allocation10 + $0x120] sm:$0xf]
    %v374 = vld [vmem:[#allocation10 + $0x124] sm:$0xf]
    %v375 = vld [vmem:[#allocation10 + $0x128] sm:$0xf]
    %v376 = vld [vmem:[#allocation10 + $0x12c] sm:$0xf]
    %v377 = vld [vmem:[#allocation10 + $0x130] sm:$0xf]
    %v378 = vld [vmem:[#allocation10 + $0x134] sm:$0xf]
    %v379 = vld [vmem:[#allocation10 + $0x138] sm:$0xf]
    %v380 = vld [vmem:[#allocation10 + $0x13c] sm:$0xf]
    %v381 = vld [vmem:[#allocation10 + $0x140] sm:$0xf]
    %v382 = vld [vmem:[#allocation10 + $0x144] sm:$0xf]
    %v383 = vld [vmem:[#allocation10 + $0x148] sm:$0xf]
    %v384 = vld [vmem:[#allocation10 + $0x14c] sm:$0xf]
    %v385 = vld [vmem:[#allocation10 + $0x150] sm:$0xf]
    %v386 = vld [vmem:[#allocation10 + $0x154] sm:$0xf]
    %v387 = vld [vmem:[#allocation10 + $0x158] sm:$0xf]
    %v388 = vld [vmem:[#allocation10 + $0x15c] sm:$0xf]
    %v389 = vld [vmem:[#allocation10 + $0x160] sm:$0xf]
    %v390 = vld [vmem:[#allocation10 + $0x164] sm:$0xf]
    %v391 = vld [vmem:[#allocation10 + $0x168] sm:$0xf]
    %v392 = vld [vmem:[#allocation10 + $0x16c] sm:$0xf]
    %v393 = vld [vmem:[#allocation10 + $0x170] sm:$0xf]
    %v394 = vld [vmem:[#allocation10 + $0x174] sm:$0xf]
    %v395 = vld [vmem:[#allocation10 + $0x178] sm:$0xf]
    %v396 = vld [vmem:[#allocation10 + $0x17c] sm:$0xf]
    %v397 = vld [vmem:[%s5] sm:$0x1]
    %v399 = vlaneseq
    %v400 = vshrl.u32 %v399, 7
    %v401 = vsub.s32 0, %v400
    %v402 = vrot.slane %v397, %v401
    %v500 = vunpack.c.l.b16 %v301
    %v501 = vunpack.c.l.b16 %v302
    %v502 = vunpack.c.l.b16 %v303
    %v503 = vunpack.c.l.b16 %v304
    %v504 = vunpack.c.l.b16 %v305
    %v505 = vunpack.c.l.b16 %v306
    %v506 = vunpack.c.l.b16 %v307
    %v507 = vunpack.c.l.b16 %v308
    %v508 = vunpack.c.l.b16 %v309
    %v509 = vunpack.c.l.b16 %v310
    %v510 = vunpack.c.l.b16 %v311
    %v511 = vunpack.c.l.b16 %v312
    %v512 = vunpack.c.l.b16 %v313
    %v513 = vunpack.c.l.b16 %v314
    %v514 = vunpack.c.l.b16 %v315
    %v515 = vunpack.c.l.b16 %v316
    %v516 = vunpack.c.l.b16 %v317
    %v517 = vunpack.c.l.b16 %v318
    %v518 = vunpack.c.l.b16 %v319
    %v519 = vunpack.c.l.b16 %v320
    %v520 = vunpack.c.l.b16 %v321
    %v521 = vunpack.c.l.b16 %v322
    %v522 = vunpack.c.l.b16 %v323
    %v523 = vunpack.c.l.b16 %v324
    %v524 = vunpack.c.l.b16 %v325
    %v525 = vunpack.c.l.b16 %v326
    %v526 = vunpack.c.l.b16 %v327
    %v527 = vunpack.c.l.b16 %v328
    %v528 = vunpack.c.l.b16 %v329
    %v529 = vunpack.c.l.b16 %v330
    %v530 = vunpack.c.l.b16 %v331
    %v531 = vunpack.c.l.b16 %v332
    %v532 = vunpack.c.l.b16 %v333
    %v533 = vunpack.c.l.b16 %v334
    %v534 = vunpack.c.l.b16 %v335
    %v535 = vunpack.c.l.b16 %v336
    %v536 = vunpack.c.l.b16 %v337
    %v537 = vunpack.c.l.b16 %v338
    %v538 = vunpack.c.l.b16 %v339
    %v539 = vunpack.c.l.b16 %v340
    %v540 = vunpack.c.l.b16 %v341
    %v541 = vunpack.c.l.b16 %v342
    %v542 = vunpack.c.l.b16 %v343
    %v543 = vunpack.c.l.b16 %v344
    %v544 = vunpack.c.l.b16 %v345
    %v545 = vunpack.c.l.b16 %v346
    %v546 = vunpack.c.l.b16 %v347
    %v547 = vunpack.c.l.b16 %v348
    %v548 = vunpack.c.l.b16 %v349
    %v549 = vunpack.c.l.b16 %v350
    %v550 = vunpack.c.l.b16 %v351
    %v551 = vunpack.c.l.b16 %v352
    %v552 = vunpack.c.l.b16 %v353
    %v553 = vunpack.c.l.b16 %v354
    %v554 = vunpack.c.l.b16 %v355
    %v555 = vunpack.c.l.b16 %v356
    %v556 = vunpack.c.l.b16 %v357
    %v557 = vunpack.c.l.b16 %v358
    %v558 = vunpack.c.l.b16 %v359
    %v559 = vunpack.c.l.b16 %v360
    %v560 = vunpack.c.l.b16 %v361
    %v561 = vunpack.c.l.b16 %v362
    %v562 = vunpack.c.l.b16 %v363
    %v563 = vunpack.c.l.b16 %v364
    %v564 = vunpack.c.l.b16 %v365
    %v565 = vunpack.c.l.b16 %v366
    %v566 = vunpack.c.l.b16 %v367
    %v567 = vunpack.c.l.b16 %v368
    %v568 = vunpack.c.l.b16 %v369
    %v569 = vunpack.c.l.b16 %v370
    %v570 = vunpack.c.l.b16 %v371
    %v571 = vunpack.c.l.b16 %v372
    %v572 = vunpack.c.l.b16 %v373
    %v573 = vunpack.c.l.b16 %v374
    %v574 = vunpack.c.l.b16 %v375
    %v575 = vunpack.c.l.b16 %v376
    %v576 = vunpack.c.l.b16 %v377
    %v577 = vunpack.c.l.b16 %v378
    %v578 = vunpack.c.l.b16 %v379
    %v579 = vunpack.c.l.b16 %v380
    %v580 = vunpack.c.l.b16 %v381
    %v581 = vunpack.c.l.b16 %v382
    %v582 = vunpack.c.l.b16 %v383
    %v583 = vunpack.c.l.b16 %v384
    %v584 = vunpack.c.l.b16 %v385
    %v585 = vunpack.c.l.b16 %v386
    %v586 = vunpack.c.l.b16 %v387
    %v587 = vunpack.c.l.b16 %v388
    %v588 = vunpack.c.l.b16 %v389
    %v589 = vunpack.c.l.b16 %v390
    %v590 = vunpack.c.l.b16 %v391
    %v591 = vunpack.c.l.b16 %v392
    %v592 = vunpack.c.l.b16 %v393
    %v593 = vunpack.c.l.b16 %v394
    %v594 = vunpack.c.l.b16 %v395
    %v595 = vunpack.c.l.b16 %v396
    %v596 = vpack.c.b16 %v501, %v500
    %v597 = vpack.c.b16 %v503, %v502
    %v598 = vpack.c.b16 %v505, %v504
    %v599 = vpack.c.b16 %v507, %v506
    %v600 = vpack.c.b16 %v509, %v508
    %v601 = vpack.c.b16 %v511, %v510
    %v602 = vpack.c.b16 %v513, %v512
    %v603 = vpack.c.b16 %v515, %v514
    %v604 = vpack.c.b16 %v517, %v516
    %v605 = vpack.c.b16 %v519, %v518
    %v606 = vpack.c.b16 %v521, %v520
    %v607 = vpack.c.b16 %v523, %v522
    %v608 = vpack.c.b16 %v525, %v524
    %v609 = vpack.c.b16 %v527, %v526
    %v610 = vpack.c.b16 %v529, %v528
    %v611 = vpack.c.b16 %v531, %v530
    %v612 = vpack.c.b16 %v533, %v532
    %v613 = vpack.c.b16 %v535, %v534
    %v614 = vpack.c.b16 %v537, %v536
    %v615 = vpack.c.b16 %v539, %v538
    %v616 = vpack.c.b16 %v541, %v540
    %v617 = vpack.c.b16 %v543, %v542
    %v618 = vpack.c.b16 %v545, %v544
    %v619 = vpack.c.b16 %v547, %v546
    %v620 = vpack.c.b16 %v549, %v548
    %v621 = vpack.c.b16 %v551, %v550
    %v622 = vpack.c.b16 %v553, %v552
    %v623 = vpack.c.b16 %v555, %v554
    %v624 = vpack.c.b16 %v557, %v556
    %v625 = vpack.c.b16 %v559, %v558
    %v626 = vpack.c.b16 %v561, %v560
    %v627 = vpack.c.b16 %v563, %v562
    %v628 = vpack.c.b16 %v565, %v564
    %v629 = vpack.c.b16 %v567, %v566
    %v630 = vpack.c.b16 %v569, %v568
    %v631 = vpack.c.b16 %v571, %v570
    %v632 = vpack.c.b16 %v573, %v572
    %v633 = vpack.c.b16 %v575, %v574
    %v634 = vpack.c.b16 %v577, %v576
    %v635 = vpack.c.b16 %v579, %v578
    %v636 = vpack.c.b16 %v581, %v580
    %v637 = vpack.c.b16 %v583, %v582
    %v638 = vpack.c.b16 %v585, %v584
    %v639 = vpack.c.b16 %v587, %v586
    %v640 = vpack.c.b16 %v589, %v588
    %v641 = vpack.c.b16 %v591, %v590
    %v642 = vpack.c.b16 %v593, %v592
    %v643 = vpack.c.b16 %v595, %v594
    %692 = vmatprep.subr.bf16.mxu0 0
    %693 = vmatpush1.bf16.msra.mxu0 %v596
    %694 = vmatprep.subr.bf16.mxu0 0
    %695 = vmatpush1.bf16.msra.mxu0 %v597
    %696 = vmatprep.subr.bf16.mxu0 0
    %697 = vmatpush1.bf16.msra.mxu0 %v598
    %698 = vmatprep.subr.bf16.mxu0 0
    %699 = vmatpush1.bf16.msra.mxu0 %v599
    %700 = vmatprep.subr.bf16.mxu0 0
    %701 = vmatpush1.bf16.msra.mxu0 %v600
    %702 = vmatprep.subr.bf16.mxu0 0
    %703 = vmatpush1.bf16.msra.mxu0 %v601
    %704 = vmatprep.subr.bf16.mxu0 0
    %705 = vmatpush1.bf16.msra.mxu0 %v602
    %706 = vmatprep.subr.bf16.mxu0 0
    %707 = vmatpush1.bf16.msra.mxu0 %v603
    %708 = vmatprep.subr.bf16.mxu0 0
    %709 = vmatpush1.bf16.msra.mxu0 %v604
    %710 = vmatprep.subr.bf16.mxu0 0
    %711 = vmatpush1.bf16.msra.mxu0 %v605
    %712 = vmatprep.subr.bf16.mxu0 0
    %713 = vmatpush1.bf16.msra.mxu0 %v606
    %714 = vmatprep.subr.bf16.mxu0 0
    %715 = vmatpush1.bf16.msra.mxu0 %v607
    %716 = vmatprep.subr.bf16.mxu0 0
    %717 = vmatpush1.bf16.msra.mxu0 %v608
    %718 = vmatprep.subr.bf16.mxu0 0
    %719 = vmatpush1.bf16.msra.mxu0 %v609
    %720 = vmatprep.subr.bf16.mxu0 0
    %721 = vmatpush1.bf16.msra.mxu0 %v610
    %722 = vmatprep.subr.bf16.mxu0 0
    %723 = vmatpush1.bf16.msra.mxu0 %v611
    %724 = vmatprep.mubr.bf16.mxu0 %v296
    %725 = vmatmul.mubr.bf16.gmra.mrb[0].mxu0 %v295
    %v726 = vpop.f32.mrb[0].mxu0
    %v727 = vadd.f32 %v402, %v726
    %v728 = vpop.f32.mrb[0].mxu0
    %v729 = vpop.f32.mrb[0].mxu0
    %v730 = vadd.f32 %v402, %v729
    %v731 = vpop.f32.mrb[0].mxu0
    %732 = vdwg.mxu0
    %733 = vmatprep.subr.bf16.mxu0 0
    %734 = vmatpush1.bf16.msra.mxu0 %v612
    %735 = vmatprep.subr.bf16.mxu0 0
    %736 = vmatpush1.bf16.msra.mxu0 %v613
    %737 = vmatprep.subr.bf16.mxu0 0
    %738 = vmatpush1.bf16.msra.mxu0 %v614
    %739 = vmatprep.subr.bf16.mxu0 0
    %740 = vmatpush1.bf16.msra.mxu0 %v615
    %741 = vmatprep.subr.bf16.mxu0 0
    %742 = vmatpush1.bf16.msra.mxu0 %v616
    %743 = vmatprep.subr.bf16.mxu0 0
    %744 = vmatpush1.bf16.msra.mxu0 %v617
    %745 = vmatprep.subr.bf16.mxu0 0
    %746 = vmatpush1.bf16.msra.mxu0 %v618
    %747 = vmatprep.subr.bf16.mxu0 0
    %748 = vmatpush1.bf16.msra.mxu0 %v619
    %749 = vmatprep.subr.bf16.mxu0 0
    %750 = vmatpush1.bf16.msra.mxu0 %v620
    %751 = vmatprep.subr.bf16.mxu0 0
    %752 = vmatpush1.bf16.msra.mxu0 %v621
    %753 = vmatprep.subr.bf16.mxu0 0
    %754 = vmatpush1.bf16.msra.mxu0 %v622
    %755 = vmatprep.subr.bf16.mxu0 0
    %756 = vmatpush1.bf16.msra.mxu0 %v623
    %757 = vmatprep.subr.bf16.mxu0 0
    %758 = vmatpush1.bf16.msra.mxu0 %v624
    %759 = vmatprep.subr.bf16.mxu0 0
    %760 = vmatpush1.bf16.msra.mxu0 %v625
    %761 = vmatprep.subr.bf16.mxu0 0
    %762 = vmatpush1.bf16.msra.mxu0 %v626
    %763 = vmatprep.subr.bf16.mxu0 0
    %764 = vmatpush1.bf16.msra.mxu0 %v627
    %765 = vmatprep.mubr.bf16.mxu0 %v298
    %766 = vmatmul.mubr.bf16.gmra.mrb[0].mxu0 %v297
    %v767 = vpop.f32.mrb[0].mxu0
    %v768 = vadd.f32 %v727, %v767
    %v769 = vpop.f32.mrb[0].mxu0
    %v770 = vpop.f32.mrb[0].mxu0
    %v771 = vadd.f32 %v730, %v770
    %v772 = vpop.f32.mrb[0].mxu0
    %773 = vdwg.mxu0
    %774 = vmatprep.subr.bf16.mxu0 0
    %775 = vmatpush1.bf16.msra.mxu0 %v628
    %776 = vmatprep.subr.bf16.mxu0 0
    %777 = vmatpush1.bf16.msra.mxu0 %v629
    %778 = vmatprep.subr.bf16.mxu0 0
    %779 = vmatpush1.bf16.msra.mxu0 %v630
    %780 = vmatprep.subr.bf16.mxu0 0
    %781 = vmatpush1.bf16.msra.mxu0 %v631
    %782 = vmatprep.subr.bf16.mxu0 0
    %783 = vmatpush1.bf16.msra.mxu0 %v632
    %784 = vmatprep.subr.bf16.mxu0 0
    %785 = vmatpush1.bf16.msra.mxu0 %v633
    %786 = vmatprep.subr.bf16.mxu0 0
    %787 = vmatpush1.bf16.msra.mxu0 %v634
    %788 = vmatprep.subr.bf16.mxu0 0
    %789 = vmatpush1.bf16.msra.mxu0 %v635
    %790 = vmatprep.subr.bf16.mxu0 0
    %791 = vmatpush1.bf16.msra.mxu0 %v636
    %792 = vmatprep.subr.bf16.mxu0 0
    %793 = vmatpush1.bf16.msra.mxu0 %v637
    %794 = vmatprep.subr.bf16.mxu0 0
    %795 = vmatpush1.bf16.msra.mxu0 %v638
    %796 = vmatprep.subr.bf16.mxu0 0
    %797 = vmatpush1.bf16.msra.mxu0 %v639
    %798 = vmatprep.subr.bf16.mxu0 0
    %799 = vmatpush1.bf16.msra.mxu0 %v640
    %800 = vmatprep.subr.bf16.mxu0 0
    %801 = vmatpush1.bf16.msra.mxu0 %v641
    %802 = vmatprep.subr.bf16.mxu0 0
    %803 = vmatpush1.bf16.msra.mxu0 %v642
    %804 = vmatprep.subr.bf16.mxu0 0
    %805 = vmatpush1.bf16.msra.mxu0 %v643
    %806 = vmatprep.mubr.bf16.mxu0 %v300
    %807 = vmatmul.mubr.bf16.gmra.mrb[0].mxu0 %v299
    %v808 = vpop.f32.mrb[0].mxu0
    %v809 = vadd.f32 %v768, %v808
    %v810 = vpop.f32.mrb[0].mxu0
    %v811 = vpop.f32.mrb[0].mxu0
    %v812 = vadd.f32 %v771, %v811
    %v813 = vpop.f32.mrb[0].mxu0
    %814 = vdwg.mxu0
    %v815 = vxor.u32 %v809, 2147483648
    %v816 = vxor.u32 %v812, 2147483648
    %v817 = vmul.f32 %v815, 1.442695
    %v818 = vpow.pop %v817
    %v819 = vmul.f32 %v816, 1.442695
    %v820 = vpow.pop %v819
    %v821 = vadd.f32 %v818, 1.0
    %v822 = vadd.f32 %v820, 1.0
    %v823 = vrcp.pop %v821
    %v824 = vmul.f32 1.0, %v823
    %v825 = vrcp.pop %v822
    %v826 = vmul.f32 1.0, %v825
    %v827 = vmul.f32 %v824, %v824
    %v828 = vmul.f32 %v826, %v826
    %v829 = vmul.f32 %v827, %v827
    %v830 = vmul.f32 %v828, %v828
    %831 = vst [vmem:[#allocation11] sm:$0xff] %v829
    %832 = vst [vmem:[#allocation11 + $0x8] sm:$0xff] %v830
    // Predicated region
    $region42: #{tpu_custom_call.1} parent=1 // pred_check
      _
    $region43: #{tpu_custom_call.1} parent=1 // pred_check_branch
      %834 = sbr.rel (0) target = $region45
    $region44: #{tpu_custom_call.1} parent=1 // pred_region
      %s836 = ssub.s32 256, 256
      %837 = vsyncadd [#allocation5], %s836
      %s838 = sshll.u32 [#allocation11], 4
      %s839 = int_to_ptr.vmem [resolvable:$true] %s838
      %844 = dma.vmem_to_hbm [thread:$0]  %s839, 256, %s6, [#allocation5], 128, 128, 8
    $region45: #{tpu_custom_call.1} parent=1 // pred_fallthru
      _
    // Predicated region
    $region46: #{tpu_custom_call.1} parent=1 // pred_check
      _
    $region47: #{tpu_custom_call.1} parent=1 // pred_check_branch
      %846 = sbr.rel (0) target = $region49
    $region48: #{tpu_custom_call.1} parent=1 // pred_region
      %847 = dma.done [#allocation5], 256
    $region49: #{tpu_custom_call.1} parent=1 // pred_fallthru
      _
    %848 = vsyncpa [#allocation4], 1
    %849 = vsyncpa [#allocation9], 1
    %850 = vsyncpa [#allocation5], 1
    %851 = vsyncpa [#allocation6], 1

</llo_original>
